<compile_context>
chip_gen: v7x
topology: tpu7x:2x2x1
jax: 0.10.0
libtpu: 0.0.40
codegen_flags: <defaults>
</compile_context>

<pallas_src>
import math
import functools

import jax
import jax.numpy as jnp
from jax import lax
from jax.experimental import pallas as pl
from jax.experimental.pallas import tpu as pltpu

# ----------------------- EncoderConfig stand-in ----------------------------
EMB = 128            # EncoderConfig.embedding_dimension
INTERMEDIATE = 256   # EncoderConfig.intermediate_size
SEQ = 118            # sequence length produced by the encoder CNN

_SINGLE_TILE_MAX_ROWS = 2048   # whole working set fits VMEM -> one block
_TILE_ROWS = 256               # aligned M tile for the (rare) large-M path


# ----------------------------- Pallas kernel -------------------------------
def _mlp_kernel(x_ref, w1_ref, b1_ref, w2_ref, b2_ref, o_ref):
    """out = GELU_exact(x @ W1 + b1) @ W2 + b2; intermediate stays in VMEM."""
    x = x_ref[...].astype(jnp.bfloat16)                       # (tm, E)
    h = jnp.dot(x, w1_ref[...], preferred_element_type=jnp.float32)
    h = h + b1_ref[...]                                        # (1, I) f32 broadcast
    # exact erf GELU (matches nn.GELU() default)
    h = 0.5 * h * (1.0 + lax.erf(h * (1.0 / math.sqrt(2.0))))
    y = jnp.dot(h.astype(jnp.bfloat16), w2_ref[...],
                preferred_element_type=jnp.float32)
    y = y + b2_ref[...]                                        # (1, E) f32 broadcast
    # nn.Dropout is identity at inference time.
    o_ref[...] = y.astype(o_ref.dtype)


def mlp_forward(hidden_states, w1, b1, w2, b2):
    """hidden_states: (..., EMB) -> (..., EMB); fused Linear-GELU-Linear."""
    orig_shape = hidden_states.shape
    E = orig_shape[-1]
    I = w1.shape[1]
    assert w1.shape == (E, I) and w2.shape == (I, E)

    x2 = hidden_states.reshape(-1, E)          # free metadata reshape
    M = x2.shape[0]

    w1 = w1.astype(jnp.bfloat16)               # no-ops if already bf16
    w2 = w2.astype(jnp.bfloat16)
    b1 = b1.reshape(1, I).astype(jnp.float32)
    b2 = b2.reshape(1, E).astype(jnp.float32)

    if M <= _SINGLE_TILE_MAX_ROWS:
        # One full-array block: no padding, no ragged block, single grid step.
        tm, grid = M, (1,)
        compiler_params = None
    else:
        # Large-M fallback: aligned 256-row tiles, ragged last block is
        # masked on store by Pallas (each output row depends only on its own
        # input row, so garbage padding rows never leak downstream).
        tm, grid = _TILE_ROWS, (pl.cdiv(M, _TILE_ROWS),)
        compiler_params = pltpu.CompilerParams(
            dimension_semantics=("parallel",))

    out = pl.pallas_call(
        _mlp_kernel,
        out_shape=jax.ShapeDtypeStruct((M, E), hidden_states.dtype),
        grid=grid,
        in_specs=[
            pl.BlockSpec((tm, E), lambda i: (i, 0)),   # activation tile
            pl.BlockSpec((E, I), lambda i: (0, 0)),    # W1 (resident, bf16)
            pl.BlockSpec((1, I), lambda i: (0, 0)),    # b1 (resident, f32)
            pl.BlockSpec((I, E), lambda i: (0, 0)),    # W2 (resident, bf16)
            pl.BlockSpec((1, E), lambda i: (0, 0)),    # b2 (resident, f32)
        ],
        out_specs=pl.BlockSpec((tm, E), lambda i: (i, 0)),
        compiler_params=compiler_params,
    )(x2, w1, b1, w2, b2)

    return out.reshape(orig_shape)


# ------------------------------ parameters ---------------------------------
def init_params(key):
    k1, k2 = jax.random.split(key)

    def lin(k, din, dout):
        # kaiming-uniform-ish init, stored as (in, out); weights in bf16.
        bound = 1.0 / math.sqrt(din)
        w = jax.random.uniform(k, (din, dout), jnp.float32, -bound, bound)
        b = jnp.zeros((dout,), jnp.float32)
        return w.astype(jnp.bfloat16), b

    w1, b1 = lin(k1, EMB, INTERMEDIATE)
    w2, b2 = lin(k2, INTERMEDIATE, EMB)
    return {"fc1_w": w1, "fc1_b": b1, "fc2_w": w2, "fc2_b": b2}


def mlp_reference(hidden_states, p):
    """Pure-JAX f32 reference (same bf16-quantized weights, upcast)."""
    w1 = p["fc1_w"].astype(jnp.float32)
    w2 = p["fc2_w"].astype(jnp.float32)
    h = hidden_states @ w1 + p["fc1_b"]
    h = jax.nn.gelu(h, approximate=False)
    return h @ w2 + p["fc2_b"]


# --------------------------------- main -------------------------------------
if __name__ == "__main__":
    key = jax.random.PRNGKey(0)
    pkey, xkey = jax.random.split(key)
    params = init_params(pkey)

    # (batch, seq, embedding_dimension) — shapes implied by EncoderConfig.
    hidden_states = jax.random.normal(xkey, (2, SEQ, EMB), jnp.float32)

    fwd = jax.jit(functools.partial(
        mlp_forward,
        w1=params["fc1_w"], b1=params["fc1_b"],
        w2=params["fc2_w"], b2=params["fc2_b"]))

    out = fwd(hidden_states)
    out = jax.block_until_ready(out)

    assert out.shape == (2, SEQ, EMB), out.shape
    assert bool(jnp.all(jnp.isfinite(out)))

    # sanity check against a pure-JAX reference (tolerates bf16 MXU rounding)
    ref = mlp_reference(hidden_states, params)
    assert bool(jnp.allclose(out, ref, rtol=1e-2, atol=1e-2))

    # TODO(synk): nn.Dropout(encoder_dropout) is omitted (identity at inference).
    print("KERNEL_OK")
</pallas_src>

<mosaic_0001>
module attributes {stable_mosaic.version = 11 : i64} {
  func.func @_mlp_kernel(%arg0: i32, %arg1: memref<236x128xf32, #tpu.memory_space<vmem>>, %arg2: memref<128x256xbf16, #tpu.memory_space<vmem>>, %arg3: memref<1x256xf32, #tpu.memory_space<vmem>>, %arg4: memref<256x128xbf16, #tpu.memory_space<vmem>>, %arg5: memref<1x128xf32, #tpu.memory_space<vmem>>, %arg6: memref<236x128xf32, #tpu.memory_space<vmem>>) attributes {dimension_semantics = [#tpu.dimension_semantics<arbitrary>], iteration_bounds = array<i64: 1>, scalar_prefetch = 0 : i64, scratch_operands = 0 : i64, tpu.core_type = #tpu.core_type<tc>, window_params = [{transform_indices = @transform_0, window_bounds = array<i64: 236, 128>}, {pipeline_mode = #tpu.pipeline_mode<synchronous>, transform_indices = @transform_1, window_bounds = array<i64: 128, 256>}, {pipeline_mode = #tpu.pipeline_mode<synchronous>, transform_indices = @transform_2, window_bounds = array<i64: 1, 256>}, {pipeline_mode = #tpu.pipeline_mode<synchronous>, transform_indices = @transform_3, window_bounds = array<i64: 256, 128>}, {pipeline_mode = #tpu.pipeline_mode<synchronous>, transform_indices = @transform_4, window_bounds = array<i64: 1, 128>}, {transform_indices = @transform_5, window_bounds = array<i64: 236, 128>}]} {
    %c0 = arith.constant 0 : index
    %c0_0 = arith.constant 0 : index
    %0 = vector.load %arg1[%c0, %c0_0] : memref<236x128xf32, #tpu.memory_space<vmem>>, vector<236x128xf32>
    %1 = arith.truncf %0 : vector<236x128xf32> to vector<236x128xbf16>
    %c0_1 = arith.constant 0 : index
    %c0_2 = arith.constant 0 : index
    %2 = vector.load %arg2[%c0_1, %c0_2] : memref<128x256xbf16, #tpu.memory_space<vmem>>, vector<128x256xbf16>
    %cst = arith.constant dense<0.000000e+00> : vector<236x256xf32>
    %3 = tpu.matmul %1, %2, %cst {dimension_numbers = #tpu.dot_dimension_numbers<[1], [0], [0], [1], [0, 0, 1, 1], [], []>} : vector<236x128xbf16>, vector<128x256xbf16>, vector<236x256xf32> -> vector<236x256xf32>
    %c0_3 = arith.constant 0 : index
    %c0_4 = arith.constant 0 : index
    %4 = vector.load %arg3[%c0_3, %c0_4] : memref<1x256xf32, #tpu.memory_space<vmem>>, vector<1x256xf32>
    %5 = vector.broadcast %4 : vector<1x256xf32> to vector<236x256xf32>
    %6 = arith.addf %3, %5 : vector<236x256xf32>
    %cst_5 = arith.constant 5.000000e-01 : f32
    %7 = vector.broadcast %cst_5 : f32 to vector<236x256xf32>
    %8 = arith.mulf %7, %6 : vector<236x256xf32>
    %cst_6 = arith.constant 0.707106769 : f32
    %9 = vector.broadcast %cst_6 : f32 to vector<236x256xf32>
    %10 = arith.mulf %6, %9 : vector<236x256xf32>
    %11 = math.erf %10 : vector<236x256xf32>
    %cst_7 = arith.constant 1.000000e+00 : f32
    %12 = vector.broadcast %cst_7 : f32 to vector<236x256xf32>
    %13 = arith.addf %12, %11 : vector<236x256xf32>
    %14 = arith.mulf %8, %13 : vector<236x256xf32>
    %15 = arith.truncf %14 : vector<236x256xf32> to vector<236x256xbf16>
    %c0_8 = arith.constant 0 : index
    %c0_9 = arith.constant 0 : index
    %16 = vector.load %arg4[%c0_8, %c0_9] : memref<256x128xbf16, #tpu.memory_space<vmem>>, vector<256x128xbf16>
    %cst_10 = arith.constant dense<0.000000e+00> : vector<236x128xf32>
    %17 = tpu.matmul %15, %16, %cst_10 {dimension_numbers = #tpu.dot_dimension_numbers<[1], [0], [0], [1], [0, 0, 1, 1], [], []>} : vector<236x256xbf16>, vector<256x128xbf16>, vector<236x128xf32> -> vector<236x128xf32>
    %c0_11 = arith.constant 0 : index
    %c0_12 = arith.constant 0 : index
    %18 = vector.load %arg5[%c0_11, %c0_12] : memref<1x128xf32, #tpu.memory_space<vmem>>, vector<1x128xf32>
    %19 = vector.broadcast %18 : vector<1x128xf32> to vector<236x128xf32>
    %20 = arith.addf %17, %19 : vector<236x128xf32>
    %c0_13 = arith.constant 0 : index
    %c0_14 = arith.constant 0 : index
    %21 = vector.load %arg6[%c0_13, %c0_14] : memref<236x128xf32, #tpu.memory_space<vmem>>, vector<236x128xf32>
    tpu.vector_store %arg6[%c0_13, %c0_14], %20 {strides = array<i32>} : memref<236x128xf32, #tpu.memory_space<vmem>>, vector<236x128xf32>,
    return
  }
  func.func @transform_0(%arg0: i32) -> (i32, i32) {
    %c0_i32 = arith.constant 0 : i32
    %c0_i32_0 = arith.constant 0 : i32
    return %arg0, %c0_i32 : i32, i32
  }
  func.func @transform_1(%arg0: i32) -> (i32, i32) {
    %c0_i32 = arith.constant 0 : i32
    %c0_i32_0 = arith.constant 0 : i32
    %c0_i32_1 = arith.constant 0 : i32
    return %c0_i32, %c0_i32_0 : i32, i32
  }
  func.func @transform_2(%arg0: i32) -> (i32, i32) {
    %c0_i32 = arith.constant 0 : i32
    %c0_i32_0 = arith.constant 0 : i32
    %c0_i32_1 = arith.constant 0 : i32
    return %c0_i32, %c0_i32_0 : i32, i32
  }
  func.func @transform_3(%arg0: i32) -> (i32, i32) {
    %c0_i32 = arith.constant 0 : i32
    %c0_i32_0 = arith.constant 0 : i32
    %c0_i32_1 = arith.constant 0 : i32
    return %c0_i32, %c0_i32_0 : i32, i32
  }
  func.func @transform_4(%arg0: i32) -> (i32, i32) {
    %c0_i32 = arith.constant 0 : i32
    %c0_i32_0 = arith.constant 0 : i32
    %c0_i32_1 = arith.constant 0 : i32
    return %c0_i32, %c0_i32_0 : i32, i32
  }
  func.func @transform_5(%arg0: i32) -> (i32, i32) {
    %c0_i32 = arith.constant 0 : i32
    %c0_i32_0 = arith.constant 0 : i32
    return %arg0, %c0_i32 : i32, i32
  }
}

</mosaic_0001>

<llo_original>
// kernel: mlp_forward.1
$region0: #{mlp_forward.1}
  #allocation0 [shape = 'u32[]', space=smem, size = 0x4, offset = 0x4, fixed_abs, tag = 'smem constant byte address 0x4 - core index']
  #allocation1 [shape = 'u32[144,128]{1,0:T(1,128)}', space=vmem, size = 0x12000, scoped, tag = 'internal scratch']
  %s0 = inlined_call_operand.vmem [shape: f32[236,128], index: 0, kind: input, shape index: {}]
  %s1 = inlined_call_operand.vmem [shape: bf16[128,256], index: 1, kind: input, shape index: {}]
  %s2 = inlined_call_operand.vmem [shape: f32[1,256], index: 2, kind: input, shape index: {}]
  %s3 = inlined_call_operand.vmem [shape: bf16[256,128], index: 3, kind: input, shape index: {}]
  %s4 = inlined_call_operand.vmem [shape: f32[1,128], index: 4, kind: input, shape index: {}]
  %s5 = inlined_call_operand.vmem [shape: f32[236,128], index: 5, kind: output, shape index: {}]
  %s6 = sld [smem:[#allocation0]]
  $region30: #{mlp_forward.1} parent=0
    _
  %s8 = ssub.s32 1, %s6
  %s9 = scalar_select 0, %s8, %s6
  // Predicated region
  $region2: #{mlp_forward.1} parent=0 // pred_check
    _
  $region3: #{mlp_forward.1} parent=0 // pred_check_branch
    %11 = sbr.rel (0) target = $region5
  $region4: #{mlp_forward.1} parent=0 // pred_region
    _
  $region5: #{mlp_forward.1} parent=0 // pred_fallthru
    _
  // Predicated region
  $region6: #{mlp_forward.1} parent=0 // pred_check
    _
  $region7: #{mlp_forward.1} parent=0 // pred_check_branch
    %13 = sbr.rel (0) target = $region9
  $region8: #{mlp_forward.1} parent=0 // pred_region
    _
  $region9: #{mlp_forward.1} parent=0 // pred_fallthru
    _
  // Predicated region
  $region10: #{mlp_forward.1} parent=0 // pred_check
    _
  $region11: #{mlp_forward.1} parent=0 // pred_check_branch
    %15 = sbr.rel (0) target = $region13
  $region12: #{mlp_forward.1} parent=0 // pred_region
    _
  $region13: #{mlp_forward.1} parent=0 // pred_fallthru
    _
  // Predicated region
  $region14: #{mlp_forward.1} parent=0 // pred_check
    _
  $region15: #{mlp_forward.1} parent=0 // pred_check_branch
    %17 = sbr.rel (0) target = $region17
  $region16: #{mlp_forward.1} parent=0 // pred_region
    _
  $region17: #{mlp_forward.1} parent=0 // pred_fallthru
    _
  // Predicated region
  $region18: #{mlp_forward.1} parent=0 // pred_check
    _
  $region19: #{mlp_forward.1} parent=0 // pred_check_branch
    %19 = sbr.rel (0) target = $region21
  $region20: #{mlp_forward.1} parent=0 // pred_region
    _
  $region21: #{mlp_forward.1} parent=0 // pred_fallthru
    _
  %v21 = vld [vmem:[%s0] sm:$0xff]
  %v22 = vld [vmem:[%s0 + $0x8] sm:$0xff]
  %v23 = vld [vmem:[%s0 + $0x10] sm:$0xff]
  %v24 = vld [vmem:[%s0 + $0x18] sm:$0xff]
  %v25 = vld [vmem:[%s0 + $0x20] sm:$0xff]
  %v26 = vld [vmem:[%s0 + $0x28] sm:$0xff]
  %v27 = vld [vmem:[%s0 + $0x30] sm:$0xff]
  %v28 = vld [vmem:[%s0 + $0x38] sm:$0xff]
  %v29 = vld [vmem:[%s0 + $0x40] sm:$0xff]
  %v30 = vld [vmem:[%s0 + $0x48] sm:$0xff]
  %v31 = vld [vmem:[%s0 + $0x50] sm:$0xff]
  %v32 = vld [vmem:[%s0 + $0x58] sm:$0xff]
  %v33 = vld [vmem:[%s0 + $0x60] sm:$0xff]
  %v34 = vld [vmem:[%s0 + $0x68] sm:$0xff]
  %v35 = vld [vmem:[%s0 + $0x70] sm:$0xff]
  %v36 = vld [vmem:[%s0 + $0x78] sm:$0xff]
  %v37 = vld [vmem:[%s0 + $0x80] sm:$0xff]
  %v38 = vld [vmem:[%s0 + $0x88] sm:$0xff]
  %v39 = vld [vmem:[%s0 + $0x90] sm:$0xff]
  %v40 = vld [vmem:[%s0 + $0x98] sm:$0xff]
  %v41 = vld [vmem:[%s0 + $0xa0] sm:$0xff]
  %v42 = vld [vmem:[%s0 + $0xa8] sm:$0xff]
  %v43 = vld [vmem:[%s0 + $0xb0] sm:$0xff]
  %v44 = vld [vmem:[%s0 + $0xb8] sm:$0xff]
  %v45 = vld [vmem:[%s0 + $0xc0] sm:$0xff]
  %v46 = vld [vmem:[%s0 + $0xc8] sm:$0xff]
  %v47 = vld [vmem:[%s0 + $0xd0] sm:$0xff]
  %v48 = vld [vmem:[%s0 + $0xd8] sm:$0xff]
  %v49 = vld [vmem:[%s0 + $0xe0] sm:$0xff]
  %v50 = vld [vmem:[%s0 + $0xe8] sm:$0xf]
  %v51 = vpack.c.bf16 %v22, %v21
  %v52 = vpack.c.bf16 %v24, %v23
  %v53 = vpack.c.bf16 %v26, %v25
  %v54 = vpack.c.bf16 %v28, %v27
  %v55 = vpack.c.bf16 %v30, %v29
  %v56 = vpack.c.bf16 %v32, %v31
  %v57 = vpack.c.bf16 %v34, %v33
  %v58 = vpack.c.bf16 %v36, %v35
  %v59 = vpack.c.bf16 %v38, %v37
  %v60 = vpack.c.bf16 %v40, %v39
  %v61 = vpack.c.bf16 %v42, %v41
  %v62 = vpack.c.bf16 %v44, %v43
  %v63 = vpack.c.bf16 %v46, %v45
  %v64 = vpack.c.bf16 %v48, %v47
  %v65 = vpack.c.bf16 %v50, %v49
  %v66 = vld [vmem:[%s1] sm:$0xff]
  %v67 = vld [vmem:[%s1 + $0x8] sm:$0xff]
  %v68 = vld [vmem:[%s1 + $0x10] sm:$0xff]
  %v69 = vld [vmem:[%s1 + $0x18] sm:$0xff]
  %v70 = vld [vmem:[%s1 + $0x20] sm:$0xff]
  %v71 = vld [vmem:[%s1 + $0x28] sm:$0xff]
  %v72 = vld [vmem:[%s1 + $0x30] sm:$0xff]
  %v73 = vld [vmem:[%s1 + $0x38] sm:$0xff]
  %v74 = vld [vmem:[%s1 + $0x40] sm:$0xff]
  %v75 = vld [vmem:[%s1 + $0x48] sm:$0xff]
  %v76 = vld [vmem:[%s1 + $0x50] sm:$0xff]
  %v77 = vld [vmem:[%s1 + $0x58] sm:$0xff]
  %v78 = vld [vmem:[%s1 + $0x60] sm:$0xff]
  %v79 = vld [vmem:[%s1 + $0x68] sm:$0xff]
  %v80 = vld [vmem:[%s1 + $0x70] sm:$0xff]
  %v81 = vld [vmem:[%s1 + $0x78] sm:$0xff]
  %v82 = vld [vmem:[%s2] sm:$0x3]
  %v84 = vlaneseq
  %v85 = vshrl.u32 %v84, 7
  %v86 = vsub.s32 0, %v85
  %v87 = vrot.slane %v82, %v86
  %v88 = vlaneseq
  %v89 = vshrl.u32 %v88, 7
  %v90 = vsub.s32 1, %v89
  %v91 = vrot.slane %v82, %v90
  %v110 = vunpack.c.l.b16 %v66
  %v111 = vunpack.c.h.b16 %v66
  %v112 = vunpack.c.l.b16 %v67
  %v113 = vunpack.c.h.b16 %v67
  %v114 = vunpack.c.l.b16 %v68
  %v115 = vunpack.c.h.b16 %v68
  %v116 = vunpack.c.l.b16 %v69
  %v117 = vunpack.c.h.b16 %v69
  %v118 = vunpack.c.l.b16 %v70
  %v119 = vunpack.c.h.b16 %v70
  %v120 = vunpack.c.l.b16 %v71
  %v121 = vunpack.c.h.b16 %v71
  %v122 = vunpack.c.l.b16 %v72
  %v123 = vunpack.c.h.b16 %v72
  %v124 = vunpack.c.l.b16 %v73
  %v125 = vunpack.c.h.b16 %v73
  %v126 = vunpack.c.l.b16 %v74
  %v127 = vunpack.c.h.b16 %v74
  %v128 = vunpack.c.l.b16 %v75
  %v129 = vunpack.c.h.b16 %v75
  %v130 = vunpack.c.l.b16 %v76
  %v131 = vunpack.c.h.b16 %v76
  %v132 = vunpack.c.l.b16 %v77
  %v133 = vunpack.c.h.b16 %v77
  %v134 = vunpack.c.l.b16 %v78
  %v135 = vunpack.c.h.b16 %v78
  %v136 = vunpack.c.l.b16 %v79
  %v137 = vunpack.c.h.b16 %v79
  %v138 = vunpack.c.l.b16 %v80
  %v139 = vunpack.c.h.b16 %v80
  %v140 = vunpack.c.l.b16 %v81
  %v141 = vunpack.c.h.b16 %v81
  %v142 = vpack.c.b16 %v112, %v110
  %v143 = vpack.c.b16 %v113, %v111
  %v144 = vpack.c.b16 %v116, %v114
  %v145 = vpack.c.b16 %v117, %v115
  %v146 = vpack.c.b16 %v120, %v118
  %v147 = vpack.c.b16 %v121, %v119
  %v148 = vpack.c.b16 %v124, %v122
  %v149 = vpack.c.b16 %v125, %v123
  %v150 = vpack.c.b16 %v128, %v126
  %v151 = vpack.c.b16 %v129, %v127
  %v152 = vpack.c.b16 %v132, %v130
  %v153 = vpack.c.b16 %v133, %v131
  %v154 = vpack.c.b16 %v136, %v134
  %v155 = vpack.c.b16 %v137, %v135
  %v156 = vpack.c.b16 %v140, %v138
  %v157 = vpack.c.b16 %v141, %v139
  %174 = vmatprep.subr.bf16.mxu0 %v143
  %175 = vmatpush1.bf16.msra.mxu0 %v142
  %176 = vmatprep.subr.bf16.mxu0 %v145
  %177 = vmatpush1.bf16.msra.mxu0 %v144
  %178 = vmatprep.subr.bf16.mxu0 %v147
  %179 = vmatpush1.bf16.msra.mxu0 %v146
  %180 = vmatprep.subr.bf16.mxu0 %v149
  %181 = vmatpush1.bf16.msra.mxu0 %v148
  %182 = vmatprep.subr.bf16.mxu0 %v151
  %183 = vmatpush1.bf16.msra.mxu0 %v150
  %184 = vmatprep.subr.bf16.mxu0 %v153
  %185 = vmatpush1.bf16.msra.mxu0 %v152
  %186 = vmatprep.subr.bf16.mxu0 %v155
  %187 = vmatpush1.bf16.msra.mxu0 %v154
  %188 = vmatprep.subr.bf16.mxu0 %v157
  %189 = vmatpush1.bf16.msra.mxu0 %v156
  %190 = vmatprep.subr.bf16.mxu0 0
  %191 = vmatpush1.bf16.msra.mxu0 0
  %192 = vmatprep.subr.bf16.mxu0 0
  %193 = vmatpush1.bf16.msra.mxu0 0
  %194 = vmatprep.subr.bf16.mxu0 0
  %195 = vmatpush1.bf16.msra.mxu0 0
  %196 = vmatprep.subr.bf16.mxu0 0
  %197 = vmatpush1.bf16.msra.mxu0 0
  %198 = vmatprep.subr.bf16.mxu0 0
  %199 = vmatpush1.bf16.msra.mxu0 0
  %200 = vmatprep.subr.bf16.mxu0 0
  %201 = vmatpush1.bf16.msra.mxu0 0
  %202 = vmatprep.subr.bf16.mxu0 0
  %203 = vmatpush1.bf16.msra.mxu0 0
  %204 = vmatprep.subr.bf16.mxu0 0
  %205 = vmatpush1.bf16.msra.mxu0 0
  %206 = vmatprep.mubr.bf16.mxu0 0
  %207 = vmatmul.mubr.bf16.gmra.mrb[0].mxu0 %v51
  %v208 = vpop.f32.mrb[0].mxu0
  %v209 = vadd.f32 %v87, %v208
  %v210 = vpop.f32.mrb[0].mxu0
  %v211 = vadd.f32 %v91, %v210
  %v212 = vpop.f32.mrb[0].mxu0
  %v213 = vadd.f32 %v87, %v212
  %v214 = vpop.f32.mrb[0].mxu0
  %v215 = vadd.f32 %v91, %v214
  %216 = vmatprep.mubr.bf16.mxu0 0
  %217 = vmatmul.mubr.bf16.gmra.mrb[0].mxu0 %v52
  %v218 = vpop.f32.mrb[0].mxu0
  %v219 = vadd.f32 %v87, %v218
  %v220 = vpop.f32.mrb[0].mxu0
  %v221 = vadd.f32 %v91, %v220
  %v222 = vpop.f32.mrb[0].mxu0
  %v223 = vadd.f32 %v87, %v222
  %v224 = vpop.f32.mrb[0].mxu0
  %v225 = vadd.f32 %v91, %v224
  %226 = vmatprep.mubr.bf16.mxu0 0
  %227 = vmatmul.mubr.bf16.gmra.mrb[0].mxu0 %v53
  %v228 = vpop.f32.mrb[0].mxu0
  %v229 = vadd.f32 %v87, %v228
  %v230 = vpop.f32.mrb[0].mxu0
  %v231 = vadd.f32 %v91, %v230
  %v232 = vpop.f32.mrb[0].mxu0
  %v233 = vadd.f32 %v87, %v232
  %v234 = vpop.f32.mrb[0].mxu0
  %v235 = vadd.f32 %v91, %v234
  %236 = vmatprep.mubr.bf16.mxu0 0
  %237 = vmatmul.mubr.bf16.gmra.mrb[0].mxu0 %v54
  %v238 = vpop.f32.mrb[0].mxu0
  %v239 = vadd.f32 %v87, %v238
  %v240 = vpop.f32.mrb[0].mxu0
  %v241 = vadd.f32 %v91, %v240
  %v242 = vpop.f32.mrb[0].mxu0
  %v243 = vadd.f32 %v87, %v242
  %v244 = vpop.f32.mrb[0].mxu0
  %v245 = vadd.f32 %v91, %v244
  %246 = vmatprep.mubr.bf16.mxu0 0
  %247 = vmatmul.mubr.bf16.gmra.mrb[0].mxu0 %v55
  %v248 = vpop.f32.mrb[0].mxu0
  %v249 = vadd.f32 %v87, %v248
  %v250 = vpop.f32.mrb[0].mxu0
  %v251 = vadd.f32 %v91, %v250
  %v252 = vpop.f32.mrb[0].mxu0
  %v253 = vadd.f32 %v87, %v252
  %v254 = vpop.f32.mrb[0].mxu0
  %v255 = vadd.f32 %v91, %v254
  %256 = vmatprep.mubr.bf16.mxu0 0
  %257 = vmatmul.mubr.bf16.gmra.mrb[0].mxu0 %v56
  %v258 = vpop.f32.mrb[0].mxu0
  %v259 = vadd.f32 %v87, %v258
  %v260 = vpop.f32.mrb[0].mxu0
  %v261 = vadd.f32 %v91, %v260
  %v262 = vpop.f32.mrb[0].mxu0
  %v263 = vadd.f32 %v87, %v262
  %v264 = vpop.f32.mrb[0].mxu0
  %v265 = vadd.f32 %v91, %v264
  %266 = vmatprep.mubr.bf16.mxu0 0
  %267 = vmatmul.mubr.bf16.gmra.mrb[0].mxu0 %v57
  %v268 = vpop.f32.mrb[0].mxu0
  %v269 = vadd.f32 %v87, %v268
  %v270 = vpop.f32.mrb[0].mxu0
  %v271 = vadd.f32 %v91, %v270
  %v272 = vpop.f32.mrb[0].mxu0
  %v273 = vadd.f32 %v87, %v272
  %v274 = vpop.f32.mrb[0].mxu0
  %v275 = vadd.f32 %v91, %v274
  %276 = vmatprep.mubr.bf16.mxu0 0
  %277 = vmatmul.mubr.bf16.gmra.mrb[0].mxu0 %v58
  %v278 = vpop.f32.mrb[0].mxu0
  %v279 = vadd.f32 %v87, %v278
  %v280 = vpop.f32.mrb[0].mxu0
  %v281 = vadd.f32 %v91, %v280
  %v282 = vpop.f32.mrb[0].mxu0
  %v283 = vadd.f32 %v87, %v282
  %v284 = vpop.f32.mrb[0].mxu0
  %v285 = vadd.f32 %v91, %v284
  %286 = vmatprep.mubr.bf16.mxu0 0
  %287 = vmatmul.mubr.bf16.gmra.mrb[0].mxu0 %v59
  %v288 = vpop.f32.mrb[0].mxu0
  %v289 = vadd.f32 %v87, %v288
  %v290 = vpop.f32.mrb[0].mxu0
  %v291 = vadd.f32 %v91, %v290
  %v292 = vpop.f32.mrb[0].mxu0
  %v293 = vadd.f32 %v87, %v292
  %v294 = vpop.f32.mrb[0].mxu0
  %v295 = vadd.f32 %v91, %v294
  %296 = vmatprep.mubr.bf16.mxu0 0
  %297 = vmatmul.mubr.bf16.gmra.mrb[0].mxu0 %v60
  %v298 = vpop.f32.mrb[0].mxu0
  %v299 = vadd.f32 %v87, %v298
  %v300 = vpop.f32.mrb[0].mxu0
  %v301 = vadd.f32 %v91, %v300
  %v302 = vpop.f32.mrb[0].mxu0
  %v303 = vadd.f32 %v87, %v302
  %v304 = vpop.f32.mrb[0].mxu0
  %v305 = vadd.f32 %v91, %v304
  %306 = vmatprep.mubr.bf16.mxu0 0
  %307 = vmatmul.mubr.bf16.gmra.mrb[0].mxu0 %v61
  %v308 = vpop.f32.mrb[0].mxu0
  %v309 = vadd.f32 %v87, %v308
  %v310 = vpop.f32.mrb[0].mxu0
  %v311 = vadd.f32 %v91, %v310
  %v312 = vpop.f32.mrb[0].mxu0
  %v313 = vadd.f32 %v87, %v312
  %v314 = vpop.f32.mrb[0].mxu0
  %v315 = vadd.f32 %v91, %v314
  %316 = vmatprep.mubr.bf16.mxu0 0
  %317 = vmatmul.mubr.bf16.gmra.mrb[0].mxu0 %v62
  %v318 = vpop.f32.mrb[0].mxu0
  %v319 = vadd.f32 %v87, %v318
  %v320 = vpop.f32.mrb[0].mxu0
  %v321 = vadd.f32 %v91, %v320
  %v322 = vpop.f32.mrb[0].mxu0
  %v323 = vadd.f32 %v87, %v322
  %v324 = vpop.f32.mrb[0].mxu0
  %v325 = vadd.f32 %v91, %v324
  %326 = vmatprep.mubr.bf16.mxu0 0
  %327 = vmatmul.mubr.bf16.gmra.mrb[0].mxu0 %v63
  %v328 = vpop.f32.mrb[0].mxu0
  %v329 = vadd.f32 %v87, %v328
  %v330 = vpop.f32.mrb[0].mxu0
  %v331 = vadd.f32 %v91, %v330
  %v332 = vpop.f32.mrb[0].mxu0
  %v333 = vadd.f32 %v87, %v332
  %v334 = vpop.f32.mrb[0].mxu0
  %v335 = vadd.f32 %v91, %v334
  %336 = vmatprep.mubr.bf16.mxu0 0
  %337 = vmatmul.mubr.bf16.gmra.mrb[0].mxu0 %v64
  %v338 = vpop.f32.mrb[0].mxu0
  %v339 = vadd.f32 %v87, %v338
  %v340 = vpop.f32.mrb[0].mxu0
  %v341 = vadd.f32 %v91, %v340
  %v342 = vpop.f32.mrb[0].mxu0
  %v343 = vadd.f32 %v87, %v342
  %v344 = vpop.f32.mrb[0].mxu0
  %v345 = vadd.f32 %v91, %v344
  %346 = vmatprep.mubr.bf16.mxu0 0
  %347 = vmatmul.mubr.bf16.gmra.mrb[0].mxu0 %v65
  %v348 = vpop.f32.mrb[0].mxu0
  %v349 = vadd.f32 %v87, %v348
  %v350 = vpop.f32.mrb[0].mxu0
  %v351 = vadd.f32 %v91, %v350
  %v352 = vpop.f32.mrb[0].mxu0
  %v353 = vadd.f32 %v87, %v352
  %v354 = vpop.f32.mrb[0].mxu0
  %v355 = vadd.f32 %v91, %v354
  %356 = vdwg.mxu0
  %v357 = vmul.f32 %v209, 0.5
  %v358 = vmul.f32 %v211, 0.5
  %v359 = vmul.f32 %v213, 0.5
  %v360 = vmul.f32 %v215, 0.5
  %v361 = vmul.f32 %v219, 0.5
  %v362 = vmul.f32 %v221, 0.5
  %v363 = vmul.f32 %v223, 0.5
  %v364 = vmul.f32 %v225, 0.5
  %v365 = vmul.f32 %v229, 0.5
  %v366 = vmul.f32 %v231, 0.5
  %v367 = vmul.f32 %v233, 0.5
  %v368 = vmul.f32 %v235, 0.5
  %v369 = vmul.f32 %v239, 0.5
  %v370 = vmul.f32 %v241, 0.5
  %v371 = vmul.f32 %v243, 0.5
  %v372 = vmul.f32 %v245, 0.5
  %v373 = vmul.f32 %v249, 0.5
  %v374 = vmul.f32 %v251, 0.5
  %v375 = vmul.f32 %v253, 0.5
  %v376 = vmul.f32 %v255, 0.5
  %v377 = vmul.f32 %v259, 0.5
  %v378 = vmul.f32 %v261, 0.5
  %v379 = vmul.f32 %v263, 0.5
  %v380 = vmul.f32 %v265, 0.5
  %v381 = vmul.f32 %v269, 0.5
  %v382 = vmul.f32 %v271, 0.5
  %v383 = vmul.f32 %v273, 0.5
  %v384 = vmul.f32 %v275, 0.5
  %v385 = vmul.f32 %v279, 0.5
  %v386 = vmul.f32 %v281, 0.5
  %v387 = vmul.f32 %v283, 0.5
  %v388 = vmul.f32 %v285, 0.5
  %v389 = vmul.f32 %v289, 0.5
  %v390 = vmul.f32 %v291, 0.5
  %v391 = vmul.f32 %v293, 0.5
  %v392 = vmul.f32 %v295, 0.5
  %v393 = vmul.f32 %v299, 0.5
  %v394 = vmul.f32 %v301, 0.5
  %v395 = vmul.f32 %v303, 0.5
  %v396 = vmul.f32 %v305, 0.5
  %v397 = vmul.f32 %v309, 0.5
  %v398 = vmul.f32 %v311, 0.5
  %v399 = vmul.f32 %v313, 0.5
  %v400 = vmul.f32 %v315, 0.5
  %v401 = vmul.f32 %v319, 0.5
  %v402 = vmul.f32 %v321, 0.5
  %v403 = vmul.f32 %v323, 0.5
  %v404 = vmul.f32 %v325, 0.5
  %v405 = vmul.f32 %v329, 0.5
  %v406 = vmul.f32 %v331, 0.5
  %v407 = vmul.f32 %v333, 0.5
  %v408 = vmul.f32 %v335, 0.5
  %v409 = vmul.f32 %v339, 0.5
  %v410 = vmul.f32 %v341, 0.5
  %v411 = vmul.f32 %v343, 0.5
  %v412 = vmul.f32 %v345, 0.5
  %v413 = vmul.f32 %v349, 0.5
  %v414 = vmul.f32 %v351, 0.5
  %v415 = vmul.f32 %v353, 0.5
  %v416 = vmul.f32 %v355, 0.5
  %v417 = vmul.f32 %v209, 0.70710677
  %v418 = vmul.f32 %v211, 0.70710677
  %v419 = vmul.f32 %v213, 0.70710677
  %v420 = vmul.f32 %v215, 0.70710677
  %v421 = vmul.f32 %v219, 0.70710677
  %v422 = vmul.f32 %v221, 0.70710677
  %v423 = vmul.f32 %v223, 0.70710677
  %v424 = vmul.f32 %v225, 0.70710677
  %v425 = vmul.f32 %v229, 0.70710677
  %v426 = vmul.f32 %v231, 0.70710677
  %v427 = vmul.f32 %v233, 0.70710677
  %v428 = vmul.f32 %v235, 0.70710677
  %v429 = vmul.f32 %v239, 0.70710677
  %v430 = vmul.f32 %v241, 0.70710677
  %v431 = vmul.f32 %v243, 0.70710677
  %v432 = vmul.f32 %v245, 0.70710677
  %v433 = vmul.f32 %v249, 0.70710677
  %v434 = vmul.f32 %v251, 0.70710677
  %v435 = vmul.f32 %v253, 0.70710677
  %v436 = vmul.f32 %v255, 0.70710677
  %v437 = vmul.f32 %v259, 0.70710677
  %v438 = vmul.f32 %v261, 0.70710677
  %v439 = vmul.f32 %v263, 0.70710677
  %v440 = vmul.f32 %v265, 0.70710677
  %v441 = vmul.f32 %v269, 0.70710677
  %v442 = vmul.f32 %v271, 0.70710677
  %v443 = vmul.f32 %v273, 0.70710677
  %v444 = vmul.f32 %v275, 0.70710677
  %v445 = vmul.f32 %v279, 0.70710677
  %v446 = vmul.f32 %v281, 0.70710677
  %v447 = vmul.f32 %v283, 0.70710677
  %v448 = vmul.f32 %v285, 0.70710677
  %v449 = vmul.f32 %v289, 0.70710677
  %v450 = vmul.f32 %v291, 0.70710677
  %v451 = vmul.f32 %v293, 0.70710677
  %v452 = vmul.f32 %v295, 0.70710677
  %v453 = vmul.f32 %v299, 0.70710677
  %v454 = vmul.f32 %v301, 0.70710677
  %v455 = vmul.f32 %v303, 0.70710677
  %v456 = vmul.f32 %v305, 0.70710677
  %v457 = vmul.f32 %v309, 0.70710677
  %v458 = vmul.f32 %v311, 0.70710677
  %v459 = vmul.f32 %v313, 0.70710677
  %v460 = vmul.f32 %v315, 0.70710677
  %v461 = vmul.f32 %v319, 0.70710677
  %v462 = vmul.f32 %v321, 0.70710677
  %v463 = vmul.f32 %v323, 0.70710677
  %v464 = vmul.f32 %v325, 0.70710677
  %v465 = vmul.f32 %v329, 0.70710677
  %v466 = vmul.f32 %v331, 0.70710677
  %v467 = vmul.f32 %v333, 0.70710677
  %v468 = vmul.f32 %v335, 0.70710677
  %v469 = vmul.f32 %v339, 0.70710677
  %v470 = vmul.f32 %v341, 0.70710677
  %v471 = vmul.f32 %v343, 0.70710677
  %v472 = vmul.f32 %v345, 0.70710677
  %v473 = vmul.f32 %v349, 0.70710677
  %v474 = vmul.f32 %v351, 0.70710677
  %v475 = vmul.f32 %v353, 0.70710677
  %v476 = vmul.f32 %v355, 0.70710677
  %v477 = verf.f32.pop %v417
  %v478 = verf.f32.pop %v418
  %v479 = verf.f32.pop %v419
  %v480 = verf.f32.pop %v420
  %v481 = verf.f32.pop %v421
  %v482 = verf.f32.pop %v422
  %v483 = verf.f32.pop %v423
  %v484 = verf.f32.pop %v424
  %v485 = verf.f32.pop %v425
  %v486 = verf.f32.pop %v426
  %v487 = verf.f32.pop %v427
  %v488 = verf.f32.pop %v428
  %v489 = verf.f32.pop %v429
  %v490 = verf.f32.pop %v430
  %v491 = verf.f32.pop %v431
  %v492 = verf.f32.pop %v432
  %v493 = verf.f32.pop %v433
  %v494 = verf.f32.pop %v434
  %v495 = verf.f32.pop %v435
  %v496 = verf.f32.pop %v436
  %v497 = verf.f32.pop %v437
  %v498 = verf.f32.pop %v438
  %v499 = verf.f32.pop %v439
  %v500 = verf.f32.pop %v440
  %v501 = verf.f32.pop %v441
  %v502 = verf.f32.pop %v442
  %v503 = verf.f32.pop %v443
  %v504 = verf.f32.pop %v444
  %v505 = verf.f32.pop %v445
  %v506 = verf.f32.pop %v446
  %v507 = verf.f32.pop %v447
  %v508 = verf.f32.pop %v448
  %v509 = verf.f32.pop %v449
  %v510 = verf.f32.pop %v450
  %v511 = verf.f32.pop %v451
  %v512 = verf.f32.pop %v452
  %v513 = verf.f32.pop %v453
  %v514 = verf.f32.pop %v454
  %v515 = verf.f32.pop %v455
  %v516 = verf.f32.pop %v456
  %v517 = verf.f32.pop %v457
  %v518 = verf.f32.pop %v458
  %v519 = verf.f32.pop %v459
  %v520 = verf.f32.pop %v460
  %v521 = verf.f32.pop %v461
  %v522 = verf.f32.pop %v462
  %v523 = verf.f32.pop %v463
  %v524 = verf.f32.pop %v464
  %v525 = verf.f32.pop %v465
  %v526 = verf.f32.pop %v466
  %v527 = verf.f32.pop %v467
  %v528 = verf.f32.pop %v468
  %v529 = verf.f32.pop %v469
  %v530 = verf.f32.pop %v470
  %v531 = verf.f32.pop %v471
  %v532 = verf.f32.pop %v472
  %v533 = verf.f32.pop %v473
  %v534 = verf.f32.pop %v474
  %v535 = verf.f32.pop %v475
  %v536 = verf.f32.pop %v476
  %v537 = vadd.f32 %v477, 1.0
  %v538 = vadd.f32 %v478, 1.0
  %v539 = vadd.f32 %v479, 1.0
  %v540 = vadd.f32 %v480, 1.0
  %v541 = vadd.f32 %v481, 1.0
  %v542 = vadd.f32 %v482, 1.0
  %v543 = vadd.f32 %v483, 1.0
  %v544 = vadd.f32 %v484, 1.0
  %v545 = vadd.f32 %v485, 1.0
  %v546 = vadd.f32 %v486, 1.0
  %v547 = vadd.f32 %v487, 1.0
  %v548 = vadd.f32 %v488, 1.0
  %v549 = vadd.f32 %v489, 1.0
  %v550 = vadd.f32 %v490, 1.0
  %v551 = vadd.f32 %v491, 1.0
  %v552 = vadd.f32 %v492, 1.0
  %v553 = vadd.f32 %v493, 1.0
  %v554 = vadd.f32 %v494, 1.0
  %v555 = vadd.f32 %v495, 1.0
  %v556 = vadd.f32 %v496, 1.0
  %v557 = vadd.f32 %v497, 1.0
  %v558 = vadd.f32 %v498, 1.0
  %v559 = vadd.f32 %v499, 1.0
  %v560 = vadd.f32 %v500, 1.0
  %v561 = vadd.f32 %v501, 1.0
  %v562 = vadd.f32 %v502, 1.0
  %v563 = vadd.f32 %v503, 1.0
  %v564 = vadd.f32 %v504, 1.0
  %v565 = vadd.f32 %v505, 1.0
  %v566 = vadd.f32 %v506, 1.0
  %v567 = vadd.f32 %v507, 1.0
  %v568 = vadd.f32 %v508, 1.0
  %v569 = vadd.f32 %v509, 1.0
  %v570 = vadd.f32 %v510, 1.0
  %v571 = vadd.f32 %v511, 1.0
  %v572 = vadd.f32 %v512, 1.0
  %v573 = vadd.f32 %v513, 1.0
  %v574 = vadd.f32 %v514, 1.0
  %v575 = vadd.f32 %v515, 1.0
  %v576 = vadd.f32 %v516, 1.0
  %v577 = vadd.f32 %v517, 1.0
  %v578 = vadd.f32 %v518, 1.0
  %v579 = vadd.f32 %v519, 1.0
  %v580 = vadd.f32 %v520, 1.0
  %v581 = vadd.f32 %v521, 1.0
  %v582 = vadd.f32 %v522, 1.0
  %v583 = vadd.f32 %v523, 1.0
  %v584 = vadd.f32 %v524, 1.0
  %v585 = vadd.f32 %v525, 1.0
  %v586 = vadd.f32 %v526, 1.0
  %v587 = vadd.f32 %v527, 1.0
  %v588 = vadd.f32 %v528, 1.0
  %v589 = vadd.f32 %v529, 1.0
  %v590 = vadd.f32 %v530, 1.0
  %v591 = vadd.f32 %v531, 1.0
  %v592 = vadd.f32 %v532, 1.0
  %v593 = vadd.f32 %v533, 1.0
  %v594 = vadd.f32 %v534, 1.0
  %v595 = vadd.f32 %v535, 1.0
  %v596 = vadd.f32 %v536, 1.0
  %v597 = vmul.f32 %v357, %v537
  %v598 = vmul.f32 %v358, %v538
  %v599 = vmul.f32 %v359, %v539
  %v600 = vmul.f32 %v360, %v540
  %v601 = vmul.f32 %v361, %v541
  %v602 = vmul.f32 %v362, %v542
  %v603 = vmul.f32 %v363, %v543
  %v604 = vmul.f32 %v364, %v544
  %v605 = vmul.f32 %v365, %v545
  %v606 = vmul.f32 %v366, %v546
  %v607 = vmul.f32 %v367, %v547
  %v608 = vmul.f32 %v368, %v548
  %v609 = vmul.f32 %v369, %v549
  %v610 = vmul.f32 %v370, %v550
  %v611 = vmul.f32 %v371, %v551
  %v612 = vmul.f32 %v372, %v552
  %v613 = vmul.f32 %v373, %v553
  %v614 = vmul.f32 %v374, %v554
  %v615 = vmul.f32 %v375, %v555
  %v616 = vmul.f32 %v376, %v556
  %v617 = vmul.f32 %v377, %v557
  %v618 = vmul.f32 %v378, %v558
  %v619 = vmul.f32 %v379, %v559
  %v620 = vmul.f32 %v380, %v560
  %v621 = vmul.f32 %v381, %v561
  %v622 = vmul.f32 %v382, %v562
  %v623 = vmul.f32 %v383, %v563
  %v624 = vmul.f32 %v384, %v564
  %v625 = vmul.f32 %v385, %v565
  %v626 = vmul.f32 %v386, %v566
  %v627 = vmul.f32 %v387, %v567
  %v628 = vmul.f32 %v388, %v568
  %v629 = vmul.f32 %v389, %v569
  %v630 = vmul.f32 %v390, %v570
  %v631 = vmul.f32 %v391, %v571
  %v632 = vmul.f32 %v392, %v572
  %v633 = vmul.f32 %v393, %v573
  %v634 = vmul.f32 %v394, %v574
  %v635 = vmul.f32 %v395, %v575
  %v636 = vmul.f32 %v396, %v576
  %v637 = vmul.f32 %v397, %v577
  %v638 = vmul.f32 %v398, %v578
  %v639 = vmul.f32 %v399, %v579
  %v640 = vmul.f32 %v400, %v580
  %v641 = vmul.f32 %v401, %v581
  %v642 = vmul.f32 %v402, %v582
  %v643 = vmul.f32 %v403, %v583
  %v644 = vmul.f32 %v404, %v584
  %v645 = vmul.f32 %v405, %v585
  %v646 = vmul.f32 %v406, %v586
  %v647 = vmul.f32 %v407, %v587
  %v648 = vmul.f32 %v408, %v588
  %v649 = vmul.f32 %v409, %v589
  %v650 = vmul.f32 %v410, %v590
  %v651 = vmul.f32 %v411, %v591
  %v652 = vmul.f32 %v412, %v592
  %v653 = vmul.f32 %v413, %v593
  %v654 = vmul.f32 %v414, %v594
  %v655 = vmul.f32 %v415, %v595
  %v656 = vmul.f32 %v416, %v596
  %v657 = vpack.c.bf16 %v599, %v597
  %v658 = vpack.c.bf16 %v600, %v598
  %v659 = vpack.c.bf16 %v603, %v601
  %v660 = vpack.c.bf16 %v604, %v602
  %v661 = vpack.c.bf16 %v607, %v605
  %v662 = vpack.c.bf16 %v608, %v606
  %v663 = vpack.c.bf16 %v611, %v609
  %v664 = vpack.c.bf16 %v612, %v610
  %v665 = vpack.c.bf16 %v615, %v613
  %v666 = vpack.c.bf16 %v616, %v614
  %v667 = vpack.c.bf16 %v619, %v617
  %v668 = vpack.c.bf16 %v620, %v618
  %v669 = vpack.c.bf16 %v623, %v621
  %v670 = vpack.c.bf16 %v624, %v622
  %v671 = vpack.c.bf16 %v627, %v625
  %v672 = vpack.c.bf16 %v628, %v626
  %v673 = vpack.c.bf16 %v631, %v629
  %v674 = vpack.c.bf16 %v632, %v630
  %v675 = vpack.c.bf16 %v635, %v633
  %v676 = vpack.c.bf16 %v636, %v634
  %v677 = vpack.c.bf16 %v639, %v637
  %v678 = vpack.c.bf16 %v640, %v638
  %v679 = vpack.c.bf16 %v643, %v641
  %v680 = vpack.c.bf16 %v644, %v642
  %v681 = vpack.c.bf16 %v647, %v645
  %v682 = vpack.c.bf16 %v648, %v646
  %v683 = vpack.c.bf16 %v651, %v649
  %v684 = vpack.c.bf16 %v652, %v650
  %v685 = vpack.c.bf16 %v655, %v653
  %v686 = vpack.c.bf16 %v656, %v654
  %v687 = vld [vmem:[%s3] sm:$0xf]
  %v688 = vld [vmem:[%s3 + $0x4] sm:$0xf]
  %v689 = vld [vmem:[%s3 + $0x8] sm:$0xf]
  %v690 = vld [vmem:[%s3 + $0xc] sm:$0xf]
  %v691 = vld [vmem:[%s3 + $0x10] sm:$0xf]
  %v692 = vld [vmem:[%s3 + $0x14] sm:$0xf]
  %v693 = vld [vmem:[%s3 + $0x18] sm:$0xf]
  %v694 = vld [vmem:[%s3 + $0x1c] sm:$0xf]
  %v695 = vld [vmem:[%s3 + $0x20] sm:$0xf]
  %v696 = vld [vmem:[%s3 + $0x24] sm:$0xf]
  %v697 = vld [vmem:[%s3 + $0x28] sm:$0xf]
  %v698 = vld [vmem:[%s3 + $0x2c] sm:$0xf]
  %v699 = vld [vmem:[%s3 + $0x30] sm:$0xf]
  %v700 = vld [vmem:[%s3 + $0x34] sm:$0xf]
  %v701 = vld [vmem:[%s3 + $0x38] sm:$0xf]
  %v702 = vld [vmem:[%s3 + $0x3c] sm:$0xf]
  %v703 = vld [vmem:[%s3 + $0x40] sm:$0xf]
  %v704 = vld [vmem:[%s3 + $0x44] sm:$0xf]
  %v705 = vld [vmem:[%s3 + $0x48] sm:$0xf]
  %v706 = vld [vmem:[%s3 + $0x4c] sm:$0xf]
  %v707 = vld [vmem:[%s3 + $0x50] sm:$0xf]
  %v708 = vld [vmem:[%s3 + $0x54] sm:$0xf]
  %v709 = vld [vmem:[%s3 + $0x58] sm:$0xf]
  %v710 = vld [vmem:[%s3 + $0x5c] sm:$0xf]
  %v711 = vld [vmem:[%s3 + $0x60] sm:$0xf]
  %v712 = vld [vmem:[%s3 + $0x64] sm:$0xf]
  %v713 = vld [vmem:[%s3 + $0x68] sm:$0xf]
  %v714 = vld [vmem:[%s3 + $0x6c] sm:$0xf]
  %v715 = vld [vmem:[%s3 + $0x70] sm:$0xf]
  %v716 = vld [vmem:[%s3 + $0x74] sm:$0xf]
  %v717 = vld [vmem:[%s3 + $0x78] sm:$0xf]
  %v718 = vld [vmem:[%s3 + $0x7c] sm:$0xf]
  %v719 = vld [vmem:[%s4] sm:$0x1]
  %v721 = vlaneseq
  %v722 = vshrl.u32 %v721, 7
  %v723 = vsub.s32 0, %v722
  %v724 = vrot.slane %v719, %v723
  %v758 = vunpack.c.l.b16 %v687
  %v759 = vunpack.c.l.b16 %v688
  %v760 = vunpack.c.l.b16 %v689
  %v761 = vunpack.c.l.b16 %v690
  %v762 = vunpack.c.l.b16 %v691
  %v763 = vunpack.c.l.b16 %v692
  %v764 = vunpack.c.l.b16 %v693
  %v765 = vunpack.c.l.b16 %v694
  %v766 = vunpack.c.l.b16 %v695
  %v767 = vunpack.c.l.b16 %v696
  %v768 = vunpack.c.l.b16 %v697
  %v769 = vunpack.c.l.b16 %v698
  %v770 = vunpack.c.l.b16 %v699
  %v771 = vunpack.c.l.b16 %v700
  %v772 = vunpack.c.l.b16 %v701
  %v773 = vunpack.c.l.b16 %v702
  %v774 = vunpack.c.l.b16 %v703
  %v775 = vunpack.c.l.b16 %v704
  %v776 = vunpack.c.l.b16 %v705
  %v777 = vunpack.c.l.b16 %v706
  %v778 = vunpack.c.l.b16 %v707
  %v779 = vunpack.c.l.b16 %v708
  %v780 = vunpack.c.l.b16 %v709
  %v781 = vunpack.c.l.b16 %v710
  %v782 = vunpack.c.l.b16 %v711
  %v783 = vunpack.c.l.b16 %v712
  %v784 = vunpack.c.l.b16 %v713
  %v785 = vunpack.c.l.b16 %v714
  %v786 = vunpack.c.l.b16 %v715
  %v787 = vunpack.c.l.b16 %v716
  %v788 = vunpack.c.l.b16 %v717
  %v789 = vunpack.c.l.b16 %v718
  %v790 = vpack.c.b16 %v759, %v758
  %v791 = vpack.c.b16 %v761, %v760
  %v792 = vpack.c.b16 %v763, %v762
  %v793 = vpack.c.b16 %v765, %v764
  %v794 = vpack.c.b16 %v767, %v766
  %v795 = vpack.c.b16 %v769, %v768
  %v796 = vpack.c.b16 %v771, %v770
  %v797 = vpack.c.b16 %v773, %v772
  %v798 = vpack.c.b16 %v775, %v774
  %v799 = vpack.c.b16 %v777, %v776
  %v800 = vpack.c.b16 %v779, %v778
  %v801 = vpack.c.b16 %v781, %v780
  %v802 = vpack.c.b16 %v783, %v782
  %v803 = vpack.c.b16 %v785, %v784
  %v804 = vpack.c.b16 %v787, %v786
  %v805 = vpack.c.b16 %v789, %v788
  %822 = vmatprep.subr.bf16.mxu0 0
  %823 = vmatpush1.bf16.msra.mxu0 %v790
  %824 = vmatprep.subr.bf16.mxu0 0
  %825 = vmatpush1.bf16.msra.mxu0 %v791
  %826 = vmatprep.subr.bf16.mxu0 0
  %827 = vmatpush1.bf16.msra.mxu0 %v792
  %828 = vmatprep.subr.bf16.mxu0 0
  %829 = vmatpush1.bf16.msra.mxu0 %v793
  %830 = vmatprep.subr.bf16.mxu0 0
  %831 = vmatpush1.bf16.msra.mxu0 %v794
  %832 = vmatprep.subr.bf16.mxu0 0
  %833 = vmatpush1.bf16.msra.mxu0 %v795
  %834 = vmatprep.subr.bf16.mxu0 0
  %835 = vmatpush1.bf16.msra.mxu0 %v796
  %836 = vmatprep.subr.bf16.mxu0 0
  %837 = vmatpush1.bf16.msra.mxu0 %v797
  %838 = vmatprep.subr.bf16.mxu0 0
  %839 = vmatpush1.bf16.msra.mxu0 %v798
  %840 = vmatprep.subr.bf16.mxu0 0
  %841 = vmatpush1.bf16.msra.mxu0 %v799
  %842 = vmatprep.subr.bf16.mxu0 0
  %843 = vmatpush1.bf16.msra.mxu0 %v800
  %844 = vmatprep.subr.bf16.mxu0 0
  %845 = vmatpush1.bf16.msra.mxu0 %v801
  %846 = vmatprep.subr.bf16.mxu0 0
  %847 = vmatpush1.bf16.msra.mxu0 %v802
  %848 = vmatprep.subr.bf16.mxu0 0
  %849 = vmatpush1.bf16.msra.mxu0 %v803
  %850 = vmatprep.subr.bf16.mxu0 0
  %851 = vmatpush1.bf16.msra.mxu0 %v804
  %852 = vmatprep.subr.bf16.mxu0 0
  %853 = vmatpush1.bf16.msra.mxu0 %v805
  %854 = vmatprep.mubr.bf16.mxu0 %v658
  %855 = vmatmul.mubr.bf16.gmra.mrb[0].mxu0 %v657
  %v856 = vpop.f32.mrb[0].mxu0
  %v857 = vadd.f32 %v724, %v856
  %v858 = vpop.f32.mrb[0].mxu0
  %v859 = vpop.f32.mrb[0].mxu0
  %v860 = vadd.f32 %v724, %v859
  %v861 = vpop.f32.mrb[0].mxu0
  %862 = vmatprep.mubr.bf16.mxu0 %v660
  %863 = vmatmul.mubr.bf16.gmra.mrb[0].mxu0 %v659
  %v864 = vpop.f32.mrb[0].mxu0
  %v865 = vadd.f32 %v724, %v864
  %v866 = vpop.f32.mrb[0].mxu0
  %v867 = vpop.f32.mrb[0].mxu0
  %v868 = vadd.f32 %v724, %v867
  %v869 = vpop.f32.mrb[0].mxu0
  %870 = vmatprep.mubr.bf16.mxu0 %v662
  %871 = vmatmul.mubr.bf16.gmra.mrb[0].mxu0 %v661
  %v872 = vpop.f32.mrb[0].mxu0
  %v873 = vadd.f32 %v724, %v872
  %v874 = vpop.f32.mrb[0].mxu0
  %v875 = vpop.f32.mrb[0].mxu0
  %v876 = vadd.f32 %v724, %v875
  %v877 = vpop.f32.mrb[0].mxu0
  %878 = vmatprep.mubr.bf16.mxu0 %v664
  %879 = vmatmul.mubr.bf16.gmra.mrb[0].mxu0 %v663
  %v880 = vpop.f32.mrb[0].mxu0
  %v881 = vadd.f32 %v724, %v880
  %v882 = vpop.f32.mrb[0].mxu0
  %v883 = vpop.f32.mrb[0].mxu0
  %v884 = vadd.f32 %v724, %v883
  %v885 = vpop.f32.mrb[0].mxu0
  %886 = vmatprep.mubr.bf16.mxu0 %v666
  %887 = vmatmul.mubr.bf16.gmra.mrb[0].mxu0 %v665
  %v888 = vpop.f32.mrb[0].mxu0
  %v889 = vadd.f32 %v724, %v888
  %v890 = vpop.f32.mrb[0].mxu0
  %v891 = vpop.f32.mrb[0].mxu0
  %v892 = vadd.f32 %v724, %v891
  %v893 = vpop.f32.mrb[0].mxu0
  %894 = vmatprep.mubr.bf16.mxu0 %v668
  %895 = vmatmul.mubr.bf16.gmra.mrb[0].mxu0 %v667
  %v896 = vpop.f32.mrb[0].mxu0
  %v897 = vadd.f32 %v724, %v896
  %v898 = vpop.f32.mrb[0].mxu0
  %v899 = vpop.f32.mrb[0].mxu0
  %v900 = vadd.f32 %v724, %v899
  %v901 = vpop.f32.mrb[0].mxu0
  %902 = vmatprep.mubr.bf16.mxu0 %v670
  %903 = vmatmul.mubr.bf16.gmra.mrb[0].mxu0 %v669
  %v904 = vpop.f32.mrb[0].mxu0
  %v905 = vadd.f32 %v724, %v904
  %v906 = vpop.f32.mrb[0].mxu0
  %v907 = vpop.f32.mrb[0].mxu0
  %v908 = vadd.f32 %v724, %v907
  %v909 = vpop.f32.mrb[0].mxu0
  %910 = vmatprep.mubr.bf16.mxu0 %v672
  %911 = vmatmul.mubr.bf16.gmra.mrb[0].mxu0 %v671
  %v912 = vpop.f32.mrb[0].mxu0
  %v913 = vadd.f32 %v724, %v912
  %v914 = vpop.f32.mrb[0].mxu0
  %v915 = vpop.f32.mrb[0].mxu0
  %v916 = vadd.f32 %v724, %v915
  %v917 = vpop.f32.mrb[0].mxu0
  %918 = vmatprep.mubr.bf16.mxu0 %v674
  %919 = vmatmul.mubr.bf16.gmra.mrb[0].mxu0 %v673
  %v920 = vpop.f32.mrb[0].mxu0
  %v921 = vadd.f32 %v724, %v920
  %v922 = vpop.f32.mrb[0].mxu0
  %v923 = vpop.f32.mrb[0].mxu0
  %v924 = vadd.f32 %v724, %v923
  %v925 = vpop.f32.mrb[0].mxu0
  %926 = vmatprep.mubr.bf16.mxu0 %v676
  %927 = vmatmul.mubr.bf16.gmra.mrb[0].mxu0 %v675
  %v928 = vpop.f32.mrb[0].mxu0
  %v929 = vadd.f32 %v724, %v928
  %v930 = vpop.f32.mrb[0].mxu0
  %v931 = vpop.f32.mrb[0].mxu0
  %v932 = vadd.f32 %v724, %v931
  %v933 = vpop.f32.mrb[0].mxu0
  %934 = vmatprep.mubr.bf16.mxu0 %v678
  %935 = vmatmul.mubr.bf16.gmra.mrb[0].mxu0 %v677
  %v936 = vpop.f32.mrb[0].mxu0
  %v937 = vadd.f32 %v724, %v936
  %v938 = vpop.f32.mrb[0].mxu0
  %v939 = vpop.f32.mrb[0].mxu0
  %v940 = vadd.f32 %v724, %v939
  %v941 = vpop.f32.mrb[0].mxu0
  %942 = vmatprep.mubr.bf16.mxu0 %v680
  %943 = vmatmul.mubr.bf16.gmra.mrb[0].mxu0 %v679
  %v944 = vpop.f32.mrb[0].mxu0
  %v945 = vadd.f32 %v724, %v944
  %v946 = vpop.f32.mrb[0].mxu0
  %v947 = vpop.f32.mrb[0].mxu0
  %v948 = vadd.f32 %v724, %v947
  %v949 = vpop.f32.mrb[0].mxu0
  %950 = vmatprep.mubr.bf16.mxu0 %v682
  %951 = vmatmul.mubr.bf16.gmra.mrb[0].mxu0 %v681
  %v952 = vpop.f32.mrb[0].mxu0
  %v953 = vadd.f32 %v724, %v952
  %v954 = vpop.f32.mrb[0].mxu0
  %v955 = vpop.f32.mrb[0].mxu0
  %v956 = vadd.f32 %v724, %v955
  %v957 = vpop.f32.mrb[0].mxu0
  %958 = vmatprep.mubr.bf16.mxu0 %v684
  %959 = vmatmul.mubr.bf16.gmra.mrb[0].mxu0 %v683
  %v960 = vpop.f32.mrb[0].mxu0
  %v961 = vadd.f32 %v724, %v960
  %v962 = vpop.f32.mrb[0].mxu0
  %v963 = vpop.f32.mrb[0].mxu0
  %v964 = vadd.f32 %v724, %v963
  %v965 = vpop.f32.mrb[0].mxu0
  %966 = vmatprep.mubr.bf16.mxu0 %v686
  %967 = vmatmul.mubr.bf16.gmra.mrb[0].mxu0 %v685
  %v968 = vpop.f32.mrb[0].mxu0
  %v969 = vadd.f32 %v724, %v968
  %v970 = vpop.f32.mrb[0].mxu0
  %v971 = vpop.f32.mrb[0].mxu0
  %v972 = vadd.f32 %v724, %v971
  %v973 = vpop.f32.mrb[0].mxu0
  %974 = vdwg.mxu0
  %975 = vst [vmem:[%s5] sm:$0xff] %v857
  %976 = vst [vmem:[%s5 + $0x8] sm:$0xff] %v860
  %977 = vst [vmem:[%s5 + $0x10] sm:$0xff] %v865
  %978 = vst [vmem:[%s5 + $0x18] sm:$0xff] %v868
  %979 = vst [vmem:[%s5 + $0x20] sm:$0xff] %v873
  %980 = vst [vmem:[%s5 + $0x28] sm:$0xff] %v876
  %981 = vst [vmem:[%s5 + $0x30] sm:$0xff] %v881
  %982 = vst [vmem:[%s5 + $0x38] sm:$0xff] %v884
  %983 = vst [vmem:[%s5 + $0x40] sm:$0xff] %v889
  %984 = vst [vmem:[%s5 + $0x48] sm:$0xff] %v892
  %985 = vst [vmem:[%s5 + $0x50] sm:$0xff] %v897
  %986 = vst [vmem:[%s5 + $0x58] sm:$0xff] %v900
  %987 = vst [vmem:[%s5 + $0x60] sm:$0xff] %v905
  %988 = vst [vmem:[%s5 + $0x68] sm:$0xff] %v908
  %989 = vst [vmem:[%s5 + $0x70] sm:$0xff] %v913
  %990 = vst [vmem:[%s5 + $0x78] sm:$0xff] %v916
  %991 = vst [vmem:[%s5 + $0x80] sm:$0xff] %v921
  %992 = vst [vmem:[%s5 + $0x88] sm:$0xff] %v924
  %993 = vst [vmem:[%s5 + $0x90] sm:$0xff] %v929
  %994 = vst [vmem:[%s5 + $0x98] sm:$0xff] %v932
  %995 = vst [vmem:[%s5 + $0xa0] sm:$0xff] %v937
  %996 = vst [vmem:[%s5 + $0xa8] sm:$0xff] %v940
  %997 = vst [vmem:[%s5 + $0xb0] sm:$0xff] %v945
  %998 = vst [vmem:[%s5 + $0xb8] sm:$0xff] %v948
  %999 = vst [vmem:[%s5 + $0xc0] sm:$0xff] %v953
  %1000 = vst [vmem:[%s5 + $0xc8] sm:$0xff] %v956
  %1001 = vst [vmem:[%s5 + $0xd0] sm:$0xff] %v961
  %1002 = vst [vmem:[%s5 + $0xd8] sm:$0xff] %v964
  %1003 = vst [vmem:[%s5 + $0xe0] sm:$0xff] %v969
  %1004 = vst [vmem:[%s5 + $0xe8] sm:$0xf] %v972
  // Predicated region
  $region22: #{mlp_forward.1} parent=0 // pred_check
    _
  $region23: #{mlp_forward.1} parent=0 // pred_check_branch
    %1006 = sbr.rel (0) target = $region25
  $region24: #{mlp_forward.1} parent=0 // pred_region
    _
  $region25: #{mlp_forward.1} parent=0 // pred_fallthru
    _
  // Predicated region
  $region26: #{mlp_forward.1} parent=0 // pred_check
    _
  $region27: #{mlp_forward.1} parent=0 // pred_check_branch
    %1008 = sbr.rel (0) target = $region29
  $region28: #{mlp_forward.1} parent=0 // pred_region
    _
  $region29: #{mlp_forward.1} parent=0 // pred_fallthru
    _

</llo_original>
